<compile_context>
chip_gen: v6e
topology: v6e:2x2x1
jax: 0.10.0
libtpu: 0.0.40
codegen_flags: <defaults>
</compile_context>

<pallas_src>
import jax
import jax.numpy as jnp
from jax.experimental import pallas as pl
from jax.experimental.pallas import tpu as pltpu

Z_DIM = 100
HID = 256
OUT = 28 * 28          # 784 = 6*128 + 16: full-extent block, masked tail vreg only

SMALL_BATCH = 512      # below this: single block (launch/DMA-latency bound)
MAX_TB = 2048          # 2 * 2048 * 784 * 4 B ~= 12.8 MB output double-buffer
TB_ALIGN = 256         # batch-tile alignment (multiple of the 8-sublane tile)
VMEM_LIMIT = 48 * 1024 * 1024   # > live VMEM at MAX_TB; < v7x 64 MiB physical


def _round_up(x, m):
    return ((x + m - 1) // m) * m


def generator_kernel(z_ref, w1_ref, b1_ref, w2_ref, b2_ref, o_ref):
    # Layer 1: Linear(100, 256) + ReLU.  f32 operands, f32 MXU accumulation.
    h = jnp.dot(z_ref[...], w1_ref[...], preferred_element_type=jnp.float32)
    h = jnp.maximum(h + b1_ref[...], 0.0)

    # Layer 2: Linear(256, 784) + Sigmoid.
    y = jnp.dot(h, w2_ref[...], preferred_element_type=jnp.float32)
    y = y + b2_ref[...]
    # jax.nn.sigmoid lowers to lax.logistic (EUP exp + reciprocal); compute is
    # fully hidden behind the HBM output stream anyway.
    o_ref[...] = jax.nn.sigmoid(y).astype(o_ref.dtype)


def _call(z, w1, b1, w2, b2, *, tb, grid_b, out_dtype):
    b_pad = z.shape[0]
    return pl.pallas_call(
        generator_kernel,
        out_shape=jax.ShapeDtypeStruct((b_pad, OUT), out_dtype),
        grid_spec=pltpu.PrefetchScalarGridSpec(
            num_scalar_prefetch=0,
            grid=(grid_b,),
            in_specs=[
                # Batch-tiled activations (double-buffered by the pipeline).
                pl.BlockSpec((tb, Z_DIM), lambda i: (i, 0)),
                # Weights/biases: constant index_map -> VMEM-resident, DMA'd
                # once (not re-fetched per grid step).
                pl.BlockSpec((Z_DIM, HID), lambda i: (0, 0)),
                pl.BlockSpec((1, HID), lambda i: (0, 0)),
                pl.BlockSpec((HID, OUT), lambda i: (0, 0)),
                pl.BlockSpec((1, OUT), lambda i: (0, 0)),
            ],
            # Final layout emitted directly: (tb, 784), no padding, no wrapper
            # slice/copy afterwards.
            out_specs=pl.BlockSpec((tb, OUT), lambda i: (i, 0)),
        ),
        compiler_params=pltpu.CompilerParams(
            # Batch axis is embarrassingly parallel -> megacore sharding on v7x.
            dimension_semantics=("parallel",),
            # Covers v5e's 16 MiB default scoped limit; < v7x 64 MiB physical.
            vmem_limit_bytes=VMEM_LIMIT,
        ),
    )(z, w1, b1, w2, b2)


def generator_forward(z, w1, b1, w2, b2, *, out_dtype=jnp.float32):
    """z: (B, 100) f32 -> (B, 1, 28, 28) out_dtype (NCHW, like PyTorch .view).

    out_dtype=jnp.bfloat16 halves the dominant HBM-store bytes if the consumer
    tolerates it; default f32 matches the PyTorch module.
    """
    B = z.shape[0]
    if B <= SMALL_BATCH:
        # Launch/DMA-latency bound regime: one full-extent block.
        tb, grid_b = B, 1
    else:
        # >= 2 grid steps for mid-size batches (uses both v7x TCs); padded
        # rows bounded by one TB_ALIGN round-up, not a full MAX_TB tile.
        tb = min(MAX_TB, _round_up(pl.cdiv(B, 2), TB_ALIGN))
        grid_b = pl.cdiv(B, tb)
    b_pad = grid_b * tb
    if b_pad != B:
        z = jnp.pad(z, ((0, b_pad - B), (0, 0)))
    flat = _call(z, w1, b1, w2, b2, tb=tb, grid_b=grid_b, out_dtype=out_dtype)
    if b_pad != B:
        flat = flat[:B]
    return flat.reshape(-1, 1, 28, 28)   # contiguous view, free


def init_params(key):
    """Init mirroring nn.Linear defaults (uniform +-1/sqrt(fan_in)).

    Weights stored as (in, out) so the kernel computes z @ W + b, equivalent
    to PyTorch's x @ W.T + b.  Everything stays f32: the kernel is HBM-output
    bound and the weights are tiny and VMEM-resident, so narrower weight
    dtypes buy no wall-clock while costing parity with the PyTorch model.
    """
    k1, k2, k3, k4 = jax.random.split(key, 4)
    bound1 = 1.0 / jnp.sqrt(jnp.float32(Z_DIM))
    bound2 = 1.0 / jnp.sqrt(jnp.float32(HID))
    w1 = jax.random.uniform(k1, (Z_DIM, HID), jnp.float32, -bound1, bound1)
    b1 = jax.random.uniform(k2, (1, HID), jnp.float32, -bound1, bound1)
    w2 = jax.random.uniform(k3, (HID, OUT), jnp.float32, -bound2, bound2)
    b2 = jax.random.uniform(k4, (1, OUT), jnp.float32, -bound2, bound2)
    return w1, b1, w2, b2


if __name__ == "__main__":
    key = jax.random.PRNGKey(0)
    kz, kp = jax.random.split(key)

    B = 8  # small batch (exercises the single-block fast path)
    z = jax.random.normal(kz, (B, Z_DIM), jnp.float32)
    w1, b1, w2, b2 = init_params(kp)

    out = generator_forward(z, w1, b1, w2, b2)
    out = jax.block_until_ready(out)

    # Plain-JAX f32 reference (kernel is now f32 end-to-end).
    h_ref = jnp.maximum(z @ w1 + b1, 0.0)
    y_ref = jax.nn.sigmoid(h_ref @ w2 + b2).reshape(-1, 1, 28, 28)

    assert out.shape == (B, 1, 28, 28), out.shape
    assert out.dtype == jnp.float32
    assert bool(jnp.all(jnp.isfinite(out)))
    assert jnp.allclose(out, y_ref, atol=1e-4, rtol=1e-4), (
        float(jnp.max(jnp.abs(out - y_ref)))
    )

    print("KERNEL_OK")
</pallas_src>

<mosaic_0001>
module attributes {stable_mosaic.version = 11 : i64} {
  func.func @generator_kernel(%arg0: i32, %arg1: memref<8x100xf32, #tpu.memory_space<vmem>>, %arg2: memref<100x256xf32, #tpu.memory_space<vmem>>, %arg3: memref<1x256xf32, #tpu.memory_space<vmem>>, %arg4: memref<256x784xf32, #tpu.memory_space<vmem>>, %arg5: memref<1x784xf32, #tpu.memory_space<vmem>>, %arg6: memref<8x784xf32, #tpu.memory_space<vmem>>) attributes {dimension_semantics = [#tpu.dimension_semantics<parallel>], iteration_bounds = array<i64: 1>, scalar_prefetch = 0 : i64, scratch_operands = 0 : i64, tpu.core_type = #tpu.core_type<tc>, window_params = [{transform_indices = @transform_0, window_bounds = array<i64: 8, 100>}, {pipeline_mode = #tpu.pipeline_mode<synchronous>, transform_indices = @transform_1, window_bounds = array<i64: 100, 256>}, {pipeline_mode = #tpu.pipeline_mode<synchronous>, transform_indices = @transform_2, window_bounds = array<i64: 1, 256>}, {pipeline_mode = #tpu.pipeline_mode<synchronous>, transform_indices = @transform_3, window_bounds = array<i64: 256, 784>}, {pipeline_mode = #tpu.pipeline_mode<synchronous>, transform_indices = @transform_4, window_bounds = array<i64: 1, 784>}, {transform_indices = @transform_5, window_bounds = array<i64: 8, 784>}]} {
    %c0 = arith.constant 0 : index
    %c0_0 = arith.constant 0 : index
    %0 = vector.load %arg1[%c0, %c0_0] : memref<8x100xf32, #tpu.memory_space<vmem>>, vector<8x100xf32>
    %c0_1 = arith.constant 0 : index
    %c0_2 = arith.constant 0 : index
    %1 = vector.load %arg2[%c0_1, %c0_2] : memref<100x256xf32, #tpu.memory_space<vmem>>, vector<100x256xf32>
    %cst = arith.constant dense<0.000000e+00> : vector<8x256xf32>
    %2 = tpu.matmul %0, %1, %cst {dimension_numbers = #tpu.dot_dimension_numbers<[1], [0], [0], [1], [0, 0, 1, 1], [], []>} : vector<8x100xf32>, vector<100x256xf32>, vector<8x256xf32> -> vector<8x256xf32>
    %c0_3 = arith.constant 0 : index
    %c0_4 = arith.constant 0 : index
    %3 = vector.load %arg3[%c0_3, %c0_4] : memref<1x256xf32, #tpu.memory_space<vmem>>, vector<1x256xf32>
    %4 = vector.broadcast %3 : vector<1x256xf32> to vector<8x256xf32>
    %5 = arith.addf %2, %4 : vector<8x256xf32>
    %cst_5 = arith.constant 0.000000e+00 : f32
    %6 = vector.broadcast %cst_5 : f32 to vector<8x256xf32>
    %7 = arith.maximumf %5, %6 : vector<8x256xf32>
    %c0_6 = arith.constant 0 : index
    %c0_7 = arith.constant 0 : index
    %8 = vector.load %arg4[%c0_6, %c0_7] : memref<256x784xf32, #tpu.memory_space<vmem>>, vector<256x784xf32>
    %cst_8 = arith.constant dense<0.000000e+00> : vector<8x784xf32>
    %9 = tpu.matmul %7, %8, %cst_8 {dimension_numbers = #tpu.dot_dimension_numbers<[1], [0], [0], [1], [0, 0, 1, 1], [], []>} : vector<8x256xf32>, vector<256x784xf32>, vector<8x784xf32> -> vector<8x784xf32>
    %c0_9 = arith.constant 0 : index
    %c0_10 = arith.constant 0 : index
    %10 = vector.load %arg5[%c0_9, %c0_10] : memref<1x784xf32, #tpu.memory_space<vmem>>, vector<1x784xf32>
    %11 = vector.broadcast %10 : vector<1x784xf32> to vector<8x784xf32>
    %12 = arith.addf %9, %11 : vector<8x784xf32>
    %13 = arith.negf %12 : vector<8x784xf32>
    %14 = math.exp %13 : vector<8x784xf32>
    %cst_11 = arith.constant 1.000000e+00 : f32
    %15 = vector.broadcast %cst_11 : f32 to vector<8x784xf32>
    %16 = arith.addf %15, %14 : vector<8x784xf32>
    %17 = arith.divf %15, %16 : vector<8x784xf32>
    %c0_12 = arith.constant 0 : index
    %c0_13 = arith.constant 0 : index
    %18 = vector.load %arg6[%c0_12, %c0_13] : memref<8x784xf32, #tpu.memory_space<vmem>>, vector<8x784xf32>
    tpu.vector_store %arg6[%c0_12, %c0_13], %17 {strides = array<i32>} : memref<8x784xf32, #tpu.memory_space<vmem>>, vector<8x784xf32>,
    return
  }
  func.func @transform_0(%arg0: i32) -> (i32, i32) {
    %c0_i32 = arith.constant 0 : i32
    %c0_i32_0 = arith.constant 0 : i32
    return %arg0, %c0_i32 : i32, i32
  }
  func.func @transform_1(%arg0: i32) -> (i32, i32) {
    %c0_i32 = arith.constant 0 : i32
    %c0_i32_0 = arith.constant 0 : i32
    %c0_i32_1 = arith.constant 0 : i32
    return %c0_i32, %c0_i32_0 : i32, i32
  }
  func.func @transform_2(%arg0: i32) -> (i32, i32) {
    %c0_i32 = arith.constant 0 : i32
    %c0_i32_0 = arith.constant 0 : i32
    %c0_i32_1 = arith.constant 0 : i32
    return %c0_i32, %c0_i32_0 : i32, i32
  }
  func.func @transform_3(%arg0: i32) -> (i32, i32) {
    %c0_i32 = arith.constant 0 : i32
    %c0_i32_0 = arith.constant 0 : i32
    %c0_i32_1 = arith.constant 0 : i32
    return %c0_i32, %c0_i32_0 : i32, i32
  }
  func.func @transform_4(%arg0: i32) -> (i32, i32) {
    %c0_i32 = arith.constant 0 : i32
    %c0_i32_0 = arith.constant 0 : i32
    %c0_i32_1 = arith.constant 0 : i32
    return %c0_i32, %c0_i32_0 : i32, i32
  }
  func.func @transform_5(%arg0: i32) -> (i32, i32) {
    %c0_i32 = arith.constant 0 : i32
    %c0_i32_0 = arith.constant 0 : i32
    return %arg0, %c0_i32 : i32, i32
  }
}

</mosaic_0001>

<llo_original>
// kernel: tpu_custom_call.1
$region0: #{tpu_custom_call.1}
  #allocation0 [shape = 'u32[]', space=smem, size = 0x4, offset = 0x4, fixed_abs, tag = 'smem constant byte address 0x4 - core index']
  #allocation1 [shape = 'u32[144,128]{1,0:T(1,128)}', space=vmem, size = 0x12000, scoped, tag = 'internal scratch']
  %s0 = inlined_call_operand.vmem [shape: f32[8,100], index: 0, kind: input, shape index: {}]
  %s1 = inlined_call_operand.vmem [shape: f32[100,256], index: 1, kind: input, shape index: {}]
  %s2 = inlined_call_operand.vmem [shape: f32[1,256], index: 2, kind: input, shape index: {}]
  %s3 = inlined_call_operand.vmem [shape: f32[256,784], index: 3, kind: input, shape index: {}]
  %s4 = inlined_call_operand.vmem [shape: f32[1,784], index: 4, kind: input, shape index: {}]
  %s5 = inlined_call_operand.hbm [shape: f32[8,784], index: 5, kind: output, shape index: {}]
  %s6 = sld [smem:[#allocation0]]
  $region30: #{tpu_custom_call.1} parent=0
    _
  %s8 = ssub.s32 1, %s6
  %s9 = scalar_select 0, %s8, %s6
  $region1: #{tpu_custom_call.1} parent=0
    #allocation2 [shape = 'u8[28672]{0}', space=vmem, size = 0x7000, scoped, tag = 'output window, operand 0, single buffered']
    #allocation3 [shape = 's32[1]{0}', space=sflag, size = 0x4, scoped, tag = 'scoped memory for tpu_custom_call.1']
    %10 = vsyncpa [#allocation3], 0
    // Predicated region
    $region2: #{tpu_custom_call.1} parent=1 // pred_check
      _
    $region3: #{tpu_custom_call.1} parent=1 // pred_check_branch
      %12 = sbr.rel (0) target = $region5
    $region4: #{tpu_custom_call.1} parent=1 // pred_region
      _
    $region5: #{tpu_custom_call.1} parent=1 // pred_fallthru
      _
    // Predicated region
    $region6: #{tpu_custom_call.1} parent=1 // pred_check
      _
    $region7: #{tpu_custom_call.1} parent=1 // pred_check_branch
      %14 = sbr.rel (0) target = $region9
    $region8: #{tpu_custom_call.1} parent=1 // pred_region
      _
    $region9: #{tpu_custom_call.1} parent=1 // pred_fallthru
      _
    // Predicated region
    $region10: #{tpu_custom_call.1} parent=1 // pred_check
      _
    $region11: #{tpu_custom_call.1} parent=1 // pred_check_branch
      %16 = sbr.rel (0) target = $region13
    $region12: #{tpu_custom_call.1} parent=1 // pred_region
      _
    $region13: #{tpu_custom_call.1} parent=1 // pred_fallthru
      _
    // Predicated region
    $region14: #{tpu_custom_call.1} parent=1 // pred_check
      _
    $region15: #{tpu_custom_call.1} parent=1 // pred_check_branch
      %18 = sbr.rel (0) target = $region17
    $region16: #{tpu_custom_call.1} parent=1 // pred_region
      _
    $region17: #{tpu_custom_call.1} parent=1 // pred_fallthru
      _
    // Predicated region
    $region18: #{tpu_custom_call.1} parent=1 // pred_check
      _
    $region19: #{tpu_custom_call.1} parent=1 // pred_check_branch
      %20 = sbr.rel (0) target = $region21
    $region20: #{tpu_custom_call.1} parent=1 // pred_region
      _
    $region21: #{tpu_custom_call.1} parent=1 // pred_fallthru
      _
    %v21 = vld [vmem:[%s0] sm:$0xff]
    %v22 = vld [vmem:[%s1] sm:$0xff]
    %v23 = vld [vmem:[%s1 + $0x8] sm:$0xff]
    %v24 = vld [vmem:[%s1 + $0x10] sm:$0xff]
    %v25 = vld [vmem:[%s1 + $0x18] sm:$0xff]
    %v26 = vld [vmem:[%s1 + $0x20] sm:$0xff]
    %v27 = vld [vmem:[%s1 + $0x28] sm:$0xff]
    %v28 = vld [vmem:[%s1 + $0x30] sm:$0xff]
    %v29 = vld [vmem:[%s1 + $0x38] sm:$0xff]
    %v30 = vld [vmem:[%s1 + $0x40] sm:$0xff]
    %v31 = vld [vmem:[%s1 + $0x48] sm:$0xff]
    %v32 = vld [vmem:[%s1 + $0x50] sm:$0xff]
    %v33 = vld [vmem:[%s1 + $0x58] sm:$0xff]
    %v34 = vld [vmem:[%s1 + $0x60] sm:$0xff]
    %v35 = vld [vmem:[%s1 + $0x68] sm:$0xff]
    %v36 = vld [vmem:[%s1 + $0x70] sm:$0xff]
    %v37 = vld [vmem:[%s1 + $0x78] sm:$0xff]
    %v38 = vld [vmem:[%s1 + $0x80] sm:$0xff]
    %v39 = vld [vmem:[%s1 + $0x88] sm:$0xff]
    %v40 = vld [vmem:[%s1 + $0x90] sm:$0xff]
    %v41 = vld [vmem:[%s1 + $0x98] sm:$0xff]
    %v42 = vld [vmem:[%s1 + $0xa0] sm:$0xff]
    %v43 = vld [vmem:[%s1 + $0xa8] sm:$0xff]
    %v44 = vld [vmem:[%s1 + $0xb0] sm:$0xff]
    %v45 = vld [vmem:[%s1 + $0xb8] sm:$0xff]
    %v46 = vld [vmem:[%s1 + $0xc0] sm:$0xf]
    %v47 = vld [vmem:[%s1 + $0xc8] sm:$0xf]
    %v48 = vld [vmem:[%s2] sm:$0x3]
    %v50 = vlaneseq
    %v51 = vshrl.u32 %v50, 7
    %v52 = vsub.s32 0, %v51
    %v53 = vrot.slane %v48, %v52
    %v54 = vlaneseq
    %v55 = vshrl.u32 %v54, 7
    %v56 = vsub.s32 1, %v55
    %v57 = vrot.slane %v48, %v56
    %vm60 = vcmask 818176
    %v62 = vsel %vm60, %v21, 0
    %vm64 = vcmask 1043456
    %v66 = vsel %vm64, %v46, 0
    %v69 = vsel %vm64, %v47, 0
    %71 = vmatprep.subr.mxu0 0.0
    %72 = vmatpush1.msra.mxu0 0.0
    %73 = vmatprep.subr.mxu0 0.0
    %74 = vmatpush1.msra.mxu0 0.0
    %75 = vmatprep.subr.mxu0 0.0
    %76 = vmatpush1.msra.mxu0 0.0
    %77 = vmatprep.subr.mxu0 %v69
    %78 = vmatpush1.msra.mxu0 %v66
    %79 = vmatprep.subr.mxu0 %v45
    %80 = vmatpush1.msra.mxu0 %v44
    %81 = vmatprep.subr.mxu0 %v43
    %82 = vmatpush1.msra.mxu0 %v42
    %83 = vmatprep.subr.mxu0 %v41
    %84 = vmatpush1.msra.mxu0 %v40
    %85 = vmatprep.subr.mxu0 %v39
    %86 = vmatpush1.msra.mxu0 %v38
    %87 = vmatprep.subr.mxu0 %v37
    %88 = vmatpush1.msra.mxu0 %v36
    %89 = vmatprep.subr.mxu0 %v35
    %90 = vmatpush1.msra.mxu0 %v34
    %91 = vmatprep.subr.mxu0 %v33
    %92 = vmatpush1.msra.mxu0 %v32
    %93 = vmatprep.subr.mxu0 %v31
    %94 = vmatpush1.msra.mxu0 %v30
    %95 = vmatprep.subr.mxu0 %v29
    %96 = vmatpush1.msra.mxu0 %v28
    %97 = vmatprep.subr.mxu0 %v27
    %98 = vmatpush1.msra.mxu0 %v26
    %99 = vmatprep.subr.mxu0 %v25
    %100 = vmatpush1.msra.mxu0 %v24
    %101 = vmatprep.subr.mxu0 %v23
    %102 = vmatpush1.msra.mxu0 %v22
    %103 = vmatprep.subr.mxu0 0.0
    %104 = vmatpush2.msra.mxu0 0.0
    %105 = vmatprep.subr.mxu0 0.0
    %106 = vmatpush2.msra.mxu0 0.0
    %107 = vmatprep.subr.mxu0 0.0
    %108 = vmatpush2.msra.mxu0 0.0
    %109 = vmatprep.subr.mxu0 0.0
    %110 = vmatpush2.msra.mxu0 0.0
    %111 = vmatprep.subr.mxu0 0.0
    %112 = vmatpush2.msra.mxu0 0.0
    %113 = vmatprep.subr.mxu0 0.0
    %114 = vmatpush2.msra.mxu0 0.0
    %115 = vmatprep.subr.mxu0 0.0
    %116 = vmatpush2.msra.mxu0 0.0
    %117 = vmatprep.subr.mxu0 0.0
    %118 = vmatpush2.msra.mxu0 0.0
    %119 = vmatprep.subr.mxu0 0.0
    %120 = vmatpush2.msra.mxu0 0.0
    %121 = vmatprep.subr.mxu0 0.0
    %122 = vmatpush2.msra.mxu0 0.0
    %123 = vmatprep.subr.mxu0 0.0
    %124 = vmatpush2.msra.mxu0 0.0
    %125 = vmatprep.subr.mxu0 0.0
    %126 = vmatpush2.msra.mxu0 0.0
    %127 = vmatprep.subr.mxu0 0.0
    %128 = vmatpush2.msra.mxu0 0.0
    %129 = vmatprep.subr.mxu0 0.0
    %130 = vmatpush2.msra.mxu0 0.0
    %131 = vmatprep.subr.mxu0 0.0
    %132 = vmatpush2.msra.mxu0 0.0
    %133 = vmatprep.subr.mxu0 0.0
    %134 = vmatpush2.msra.mxu0 0.0
    %135 = vmatprep.mubr.f32.mxu0 0.0
    %136 = vmatmul.mubr.f32.gmra.mxu0 %v62
    %v137 = vpop.f32.mrf.mxu0
    %v138 = vadd.f32 %v53, %v137
    %v139 = vpop.f32.mrf.mxu0
    %v140 = vadd.f32 %v57, %v139
    %141 = vdwg.mxu0
    %v142 = vmax.f32 %v138, 0.0
    %v143 = vmax.f32 %v140, 0.0
    %v144 = vld [vmem:[%s3] sm:$0xff]
    %v145 = vld [vmem:[%s3 + $0x8] sm:$0xff]
    %v146 = vld [vmem:[%s3 + $0x10] sm:$0xff]
    %v147 = vld [vmem:[%s3 + $0x18] sm:$0xff]
    %v148 = vld [vmem:[%s3 + $0x20] sm:$0xff]
    %v149 = vld [vmem:[%s3 + $0x28] sm:$0xff]
    %v150 = vld [vmem:[%s3 + $0x30] sm:$0xff]
    %v151 = vld [vmem:[%s3 + $0x38] sm:$0xff]
    %v152 = vld [vmem:[%s3 + $0x40] sm:$0xff]
    %v153 = vld [vmem:[%s3 + $0x48] sm:$0xff]
    %v154 = vld [vmem:[%s3 + $0x50] sm:$0xff]
    %v155 = vld [vmem:[%s3 + $0x58] sm:$0xff]
    %v156 = vld [vmem:[%s3 + $0x60] sm:$0xff]
    %v157 = vld [vmem:[%s3 + $0x68] sm:$0xff]
    %v158 = vld [vmem:[%s3 + $0x70] sm:$0xff]
    %v159 = vld [vmem:[%s3 + $0x78] sm:$0xff]
    %v160 = vld [vmem:[%s3 + $0x80] sm:$0xff]
    %v161 = vld [vmem:[%s3 + $0x88] sm:$0xff]
    %v162 = vld [vmem:[%s3 + $0x90] sm:$0xff]
    %v163 = vld [vmem:[%s3 + $0x98] sm:$0xff]
    %v164 = vld [vmem:[%s3 + $0xa0] sm:$0xff]
    %v165 = vld [vmem:[%s3 + $0xa8] sm:$0xff]
    %v166 = vld [vmem:[%s3 + $0xb0] sm:$0xff]
    %v167 = vld [vmem:[%s3 + $0xb8] sm:$0xff]
    %v168 = vld [vmem:[%s3 + $0xc0] sm:$0xff]
    %v169 = vld [vmem:[%s3 + $0xc8] sm:$0xff]
    %v170 = vld [vmem:[%s3 + $0xd0] sm:$0xff]
    %v171 = vld [vmem:[%s3 + $0xd8] sm:$0xff]
    %v172 = vld [vmem:[%s3 + $0xe0] sm:$0xff]
    %v173 = vld [vmem:[%s3 + $0xe8] sm:$0xff]
    %v174 = vld [vmem:[%s3 + $0xf0] sm:$0xff]
    %v175 = vld [vmem:[%s3 + $0xf8] sm:$0xff]
    %v176 = vld [vmem:[%s3 + $0x100] sm:$0xff]
    %v177 = vld [vmem:[%s3 + $0x108] sm:$0xff]
    %v178 = vld [vmem:[%s3 + $0x110] sm:$0xff]
    %v179 = vld [vmem:[%s3 + $0x118] sm:$0xff]
    %v180 = vld [vmem:[%s3 + $0x120] sm:$0xff]
    %v181 = vld [vmem:[%s3 + $0x128] sm:$0xff]
    %v182 = vld [vmem:[%s3 + $0x130] sm:$0xff]
    %v183 = vld [vmem:[%s3 + $0x138] sm:$0xff]
    %v184 = vld [vmem:[%s3 + $0x140] sm:$0xff]
    %v185 = vld [vmem:[%s3 + $0x148] sm:$0xff]
    %v186 = vld [vmem:[%s3 + $0x150] sm:$0xff]
    %v187 = vld [vmem:[%s3 + $0x158] sm:$0xff]
    %v188 = vld [vmem:[%s3 + $0x160] sm:$0xff]
    %v189 = vld [vmem:[%s3 + $0x168] sm:$0xff]
    %v190 = vld [vmem:[%s3 + $0x170] sm:$0xff]
    %v191 = vld [vmem:[%s3 + $0x178] sm:$0xff]
    %v192 = vld [vmem:[%s3 + $0x180] sm:$0xff]
    %v193 = vld [vmem:[%s3 + $0x188] sm:$0xff]
    %v194 = vld [vmem:[%s3 + $0x190] sm:$0xff]
    %v195 = vld [vmem:[%s3 + $0x198] sm:$0xff]
    %v196 = vld [vmem:[%s3 + $0x1a0] sm:$0xff]
    %v197 = vld [vmem:[%s3 + $0x1a8] sm:$0xff]
    %v198 = vld [vmem:[%s3 + $0x1b0] sm:$0xff]
    %v199 = vld [vmem:[%s3 + $0x1b8] sm:$0xff]
    %v200 = vld [vmem:[%s3 + $0x1c0] sm:$0xff]
    %v201 = vld [vmem:[%s3 + $0x1c8] sm:$0xff]
    %v202 = vld [vmem:[%s3 + $0x1d0] sm:$0xff]
    %v203 = vld [vmem:[%s3 + $0x1d8] sm:$0xff]
    %v204 = vld [vmem:[%s3 + $0x1e0] sm:$0xff]
    %v205 = vld [vmem:[%s3 + $0x1e8] sm:$0xff]
    %v206 = vld [vmem:[%s3 + $0x1f0] sm:$0xff]
    %v207 = vld [vmem:[%s3 + $0x1f8] sm:$0xff]
    %v208 = vld [vmem:[%s3 + $0x200] sm:$0xff]
    %v209 = vld [vmem:[%s3 + $0x208] sm:$0xff]
    %v210 = vld [vmem:[%s3 + $0x210] sm:$0xff]
    %v211 = vld [vmem:[%s3 + $0x218] sm:$0xff]
    %v212 = vld [vmem:[%s3 + $0x220] sm:$0xff]
    %v213 = vld [vmem:[%s3 + $0x228] sm:$0xff]
    %v214 = vld [vmem:[%s3 + $0x230] sm:$0xff]
    %v215 = vld [vmem:[%s3 + $0x238] sm:$0xff]
    %v216 = vld [vmem:[%s3 + $0x240] sm:$0xff]
    %v217 = vld [vmem:[%s3 + $0x248] sm:$0xff]
    %v218 = vld [vmem:[%s3 + $0x250] sm:$0xff]
    %v219 = vld [vmem:[%s3 + $0x258] sm:$0xff]
    %v220 = vld [vmem:[%s3 + $0x260] sm:$0xff]
    %v221 = vld [vmem:[%s3 + $0x268] sm:$0xff]
    %v222 = vld [vmem:[%s3 + $0x270] sm:$0xff]
    %v223 = vld [vmem:[%s3 + $0x278] sm:$0xff]
    %v224 = vld [vmem:[%s3 + $0x280] sm:$0xff]
    %v225 = vld [vmem:[%s3 + $0x288] sm:$0xff]
    %v226 = vld [vmem:[%s3 + $0x290] sm:$0xff]
    %v227 = vld [vmem:[%s3 + $0x298] sm:$0xff]
    %v228 = vld [vmem:[%s3 + $0x2a0] sm:$0xff]
    %v229 = vld [vmem:[%s3 + $0x2a8] sm:$0xff]
    %v230 = vld [vmem:[%s3 + $0x2b0] sm:$0xff]
    %v231 = vld [vmem:[%s3 + $0x2b8] sm:$0xff]
    %v232 = vld [vmem:[%s3 + $0x2c0] sm:$0xff]
    %v233 = vld [vmem:[%s3 + $0x2c8] sm:$0xff]
    %v234 = vld [vmem:[%s3 + $0x2d0] sm:$0xff]
    %v235 = vld [vmem:[%s3 + $0x2d8] sm:$0xff]
    %v236 = vld [vmem:[%s3 + $0x2e0] sm:$0xff]
    %v237 = vld [vmem:[%s3 + $0x2e8] sm:$0xff]
    %v238 = vld [vmem:[%s3 + $0x2f0] sm:$0xff]
    %v239 = vld [vmem:[%s3 + $0x2f8] sm:$0xff]
    %v240 = vld [vmem:[%s3 + $0x300] sm:$0xff]
    %v241 = vld [vmem:[%s3 + $0x308] sm:$0xff]
    %v242 = vld [vmem:[%s3 + $0x310] sm:$0xff]
    %v243 = vld [vmem:[%s3 + $0x318] sm:$0xff]
    %v244 = vld [vmem:[%s3 + $0x320] sm:$0xff]
    %v245 = vld [vmem:[%s3 + $0x328] sm:$0xff]
    %v246 = vld [vmem:[%s3 + $0x330] sm:$0xff]
    %v247 = vld [vmem:[%s3 + $0x338] sm:$0xff]
    %v248 = vld [vmem:[%s3 + $0x340] sm:$0xff]
    %v249 = vld [vmem:[%s3 + $0x348] sm:$0xff]
    %v250 = vld [vmem:[%s3 + $0x350] sm:$0xff]
    %v251 = vld [vmem:[%s3 + $0x358] sm:$0xff]
    %v252 = vld [vmem:[%s3 + $0x360] sm:$0xff]
    %v253 = vld [vmem:[%s3 + $0x368] sm:$0xff]
    %v254 = vld [vmem:[%s3 + $0x370] sm:$0xff]
    %v255 = vld [vmem:[%s3 + $0x378] sm:$0xff]
    %v256 = vld [vmem:[%s3 + $0x380] sm:$0xff]
    %v257 = vld [vmem:[%s3 + $0x388] sm:$0xff]
    %v258 = vld [vmem:[%s3 + $0x390] sm:$0xff]
    %v259 = vld [vmem:[%s3 + $0x398] sm:$0xff]
    %v260 = vld [vmem:[%s3 + $0x3a0] sm:$0xff]
    %v261 = vld [vmem:[%s3 + $0x3a8] sm:$0xff]
    %v262 = vld [vmem:[%s3 + $0x3b0] sm:$0xff]
    %v263 = vld [vmem:[%s3 + $0x3b8] sm:$0xff]
    %v264 = vld [vmem:[%s3 + $0x3c0] sm:$0xff]
    %v265 = vld [vmem:[%s3 + $0x3c8] sm:$0xff]
    %v266 = vld [vmem:[%s3 + $0x3d0] sm:$0xff]
    %v267 = vld [vmem:[%s3 + $0x3d8] sm:$0xff]
    %v268 = vld [vmem:[%s3 + $0x3e0] sm:$0xff]
    %v269 = vld [vmem:[%s3 + $0x3e8] sm:$0xff]
    %v270 = vld [vmem:[%s3 + $0x3f0] sm:$0xff]
    %v271 = vld [vmem:[%s3 + $0x3f8] sm:$0xff]
    %v272 = vld [vmem:[%s3 + $0x400] sm:$0xff]
    %v273 = vld [vmem:[%s3 + $0x408] sm:$0xff]
    %v274 = vld [vmem:[%s3 + $0x410] sm:$0xff]
    %v275 = vld [vmem:[%s3 + $0x418] sm:$0xff]
    %v276 = vld [vmem:[%s3 + $0x420] sm:$0xff]
    %v277 = vld [vmem:[%s3 + $0x428] sm:$0xff]
    %v278 = vld [vmem:[%s3 + $0x430] sm:$0xff]
    %v279 = vld [vmem:[%s3 + $0x438] sm:$0xff]
    %v280 = vld [vmem:[%s3 + $0x440] sm:$0xff]
    %v281 = vld [vmem:[%s3 + $0x448] sm:$0xff]
    %v282 = vld [vmem:[%s3 + $0x450] sm:$0xff]
    %v283 = vld [vmem:[%s3 + $0x458] sm:$0xff]
    %v284 = vld [vmem:[%s3 + $0x460] sm:$0xff]
    %v285 = vld [vmem:[%s3 + $0x468] sm:$0xff]
    %v286 = vld [vmem:[%s3 + $0x470] sm:$0xff]
    %v287 = vld [vmem:[%s3 + $0x478] sm:$0xff]
    %v288 = vld [vmem:[%s3 + $0x480] sm:$0xff]
    %v289 = vld [vmem:[%s3 + $0x488] sm:$0xff]
    %v290 = vld [vmem:[%s3 + $0x490] sm:$0xff]
    %v291 = vld [vmem:[%s3 + $0x498] sm:$0xff]
    %v292 = vld [vmem:[%s3 + $0x4a0] sm:$0xff]
    %v293 = vld [vmem:[%s3 + $0x4a8] sm:$0xff]
    %v294 = vld [vmem:[%s3 + $0x4b0] sm:$0xff]
    %v295 = vld [vmem:[%s3 + $0x4b8] sm:$0xff]
    %v296 = vld [vmem:[%s3 + $0x4c0] sm:$0xff]
    %v297 = vld [vmem:[%s3 + $0x4c8] sm:$0xff]
    %v298 = vld [vmem:[%s3 + $0x4d0] sm:$0xff]
    %v299 = vld [vmem:[%s3 + $0x4d8] sm:$0xff]
    %v300 = vld [vmem:[%s3 + $0x4e0] sm:$0xff]
    %v301 = vld [vmem:[%s3 + $0x4e8] sm:$0xff]
    %v302 = vld [vmem:[%s3 + $0x4f0] sm:$0xff]
    %v303 = vld [vmem:[%s3 + $0x4f8] sm:$0xff]
    %v304 = vld [vmem:[%s3 + $0x500] sm:$0xff]
    %v305 = vld [vmem:[%s3 + $0x508] sm:$0xff]
    %v306 = vld [vmem:[%s3 + $0x510] sm:$0xff]
    %v307 = vld [vmem:[%s3 + $0x518] sm:$0xff]
    %v308 = vld [vmem:[%s3 + $0x520] sm:$0xff]
    %v309 = vld [vmem:[%s3 + $0x528] sm:$0xff]
    %v310 = vld [vmem:[%s3 + $0x530] sm:$0xff]
    %v311 = vld [vmem:[%s3 + $0x538] sm:$0xff]
    %v312 = vld [vmem:[%s3 + $0x540] sm:$0xff]
    %v313 = vld [vmem:[%s3 + $0x548] sm:$0xff]
    %v314 = vld [vmem:[%s3 + $0x550] sm:$0xff]
    %v315 = vld [vmem:[%s3 + $0x558] sm:$0xff]
    %v316 = vld [vmem:[%s3 + $0x560] sm:$0xff]
    %v317 = vld [vmem:[%s3 + $0x568] sm:$0xff]
    %v318 = vld [vmem:[%s3 + $0x570] sm:$0xff]
    %v319 = vld [vmem:[%s3 + $0x578] sm:$0xff]
    %v320 = vld [vmem:[%s3 + $0x580] sm:$0xff]
    %v321 = vld [vmem:[%s3 + $0x588] sm:$0xff]
    %v322 = vld [vmem:[%s3 + $0x590] sm:$0xff]
    %v323 = vld [vmem:[%s3 + $0x598] sm:$0xff]
    %v324 = vld [vmem:[%s3 + $0x5a0] sm:$0xff]
    %v325 = vld [vmem:[%s3 + $0x5a8] sm:$0xff]
    %v326 = vld [vmem:[%s3 + $0x5b0] sm:$0xff]
    %v327 = vld [vmem:[%s3 + $0x5b8] sm:$0xff]
    %v328 = vld [vmem:[%s3 + $0x5c0] sm:$0xff]
    %v329 = vld [vmem:[%s3 + $0x5c8] sm:$0xff]
    %v330 = vld [vmem:[%s3 + $0x5d0] sm:$0xff]
    %v331 = vld [vmem:[%s3 + $0x5d8] sm:$0xff]
    %v332 = vld [vmem:[%s3 + $0x5e0] sm:$0xff]
    %v333 = vld [vmem:[%s3 + $0x5e8] sm:$0xff]
    %v334 = vld [vmem:[%s3 + $0x5f0] sm:$0xff]
    %v335 = vld [vmem:[%s3 + $0x5f8] sm:$0xff]
    %v336 = vld [vmem:[%s3 + $0x600] sm:$0xff]
    %v337 = vld [vmem:[%s3 + $0x608] sm:$0xff]
    %v338 = vld [vmem:[%s3 + $0x610] sm:$0xff]
    %v339 = vld [vmem:[%s3 + $0x618] sm:$0xff]
    %v340 = vld [vmem:[%s3 + $0x620] sm:$0xff]
    %v341 = vld [vmem:[%s3 + $0x628] sm:$0xff]
    %v342 = vld [vmem:[%s3 + $0x630] sm:$0xff]
    %v343 = vld [vmem:[%s3 + $0x638] sm:$0xff]
    %v344 = vld [vmem:[%s3 + $0x640] sm:$0xff]
    %v345 = vld [vmem:[%s3 + $0x648] sm:$0xff]
    %v346 = vld [vmem:[%s3 + $0x650] sm:$0xff]
    %v347 = vld [vmem:[%s3 + $0x658] sm:$0xff]
    %v348 = vld [vmem:[%s3 + $0x660] sm:$0xff]
    %v349 = vld [vmem:[%s3 + $0x668] sm:$0xff]
    %v350 = vld [vmem:[%s3 + $0x670] sm:$0xff]
    %v351 = vld [vmem:[%s3 + $0x678] sm:$0xff]
    %v352 = vld [vmem:[%s3 + $0x680] sm:$0xff]
    %v353 = vld [vmem:[%s3 + $0x688] sm:$0xff]
    %v354 = vld [vmem:[%s3 + $0x690] sm:$0xff]
    %v355 = vld [vmem:[%s3 + $0x698] sm:$0xff]
    %v356 = vld [vmem:[%s3 + $0x6a0] sm:$0xff]
    %v357 = vld [vmem:[%s3 + $0x6a8] sm:$0xff]
    %v358 = vld [vmem:[%s3 + $0x6b0] sm:$0xff]
    %v359 = vld [vmem:[%s3 + $0x6b8] sm:$0xff]
    %v360 = vld [vmem:[%s3 + $0x6c0] sm:$0xff]
    %v361 = vld [vmem:[%s3 + $0x6c8] sm:$0xff]
    %v362 = vld [vmem:[%s3 + $0x6d0] sm:$0xff]
    %v363 = vld [vmem:[%s3 + $0x6d8] sm:$0xff]
    %v364 = vld [vmem:[%s3 + $0x6e0] sm:$0xff]
    %v365 = vld [vmem:[%s3 + $0x6e8] sm:$0xff]
    %v366 = vld [vmem:[%s3 + $0x6f0] sm:$0xff]
    %v367 = vld [vmem:[%s3 + $0x6f8] sm:$0xff]
    %v368 = vld [vmem:[%s4] sm:$0x7f]
    %v370 = vlaneseq
    %v371 = vshrl.u32 %v370, 7
    %v372 = vsub.s32 0, %v371
    %v373 = vrot.slane %v368, %v372
    %v374 = vlaneseq
    %v375 = vshrl.u32 %v374, 7
    %v376 = vsub.s32 1, %v375
    %v377 = vrot.slane %v368, %v376
    %v378 = vlaneseq
    %v379 = vshrl.u32 %v378, 7
    %v380 = vsub.s32 2, %v379
    %v381 = vrot.slane %v368, %v380
    %v382 = vlaneseq
    %v383 = vshrl.u32 %v382, 7
    %v384 = vsub.s32 3, %v383
    %v385 = vrot.slane %v368, %v384
    %v386 = vlaneseq
    %v387 = vshrl.u32 %v386, 7
    %v388 = vsub.s32 4, %v387
    %v389 = vrot.slane %v368, %v388
    %v390 = vlaneseq
    %v391 = vshrl.u32 %v390, 7
    %v392 = vsub.s32 5, %v391
    %v393 = vrot.slane %v368, %v392
    %v394 = vlaneseq
    %v395 = vshrl.u32 %v394, 7
    %v396 = vsub.s32 6, %v395
    %v397 = vrot.slane %v368, %v396
    %405 = vmatprep.subr.mxu0 %v250
    %406 = vmatpush1.msra.mxu0 %v249
    %407 = vmatprep.subr.mxu0 %v243
    %408 = vmatpush1.msra.mxu0 %v242
    %409 = vmatprep.subr.mxu0 %v236
    %410 = vmatpush1.msra.mxu0 %v235
    %411 = vmatprep.subr.mxu0 %v229
    %412 = vmatpush1.msra.mxu0 %v228
    %413 = vmatprep.subr.mxu0 %v222
    %414 = vmatpush1.msra.mxu0 %v221
    %415 = vmatprep.subr.mxu0 %v215
    %416 = vmatpush1.msra.mxu0 %v214
    %417 = vmatprep.subr.mxu0 %v208
    %418 = vmatpush1.msra.mxu0 %v207
    %419 = vmatprep.subr.mxu0 %v201
    %420 = vmatpush1.msra.mxu0 %v200
    %421 = vmatprep.subr.mxu0 %v194
    %422 = vmatpush1.msra.mxu0 %v193
    %423 = vmatprep.subr.mxu0 %v187
    %424 = vmatpush1.msra.mxu0 %v186
    %425 = vmatprep.subr.mxu0 %v180
    %426 = vmatpush1.msra.mxu0 %v179
    %427 = vmatprep.subr.mxu0 %v173
    %428 = vmatpush1.msra.mxu0 %v172
    %429 = vmatprep.subr.mxu0 %v166
    %430 = vmatpush1.msra.mxu0 %v165
    %431 = vmatprep.subr.mxu0 %v159
    %432 = vmatpush1.msra.mxu0 %v158
    %433 = vmatprep.subr.mxu0 %v152
    %434 = vmatpush1.msra.mxu0 %v151
    %435 = vmatprep.subr.mxu0 %v145
    %436 = vmatpush1.msra.mxu0 %v144
    %437 = vmatprep.subr.mxu0 %v362
    %438 = vmatpush2.msra.mxu0 %v361
    %439 = vmatprep.subr.mxu0 %v355
    %440 = vmatpush2.msra.mxu0 %v354
    %441 = vmatprep.subr.mxu0 %v348
    %442 = vmatpush2.msra.mxu0 %v347
    %443 = vmatprep.subr.mxu0 %v341
    %444 = vmatpush2.msra.mxu0 %v340
    %445 = vmatprep.subr.mxu0 %v334
    %446 = vmatpush2.msra.mxu0 %v333
    %447 = vmatprep.subr.mxu0 %v327
    %448 = vmatpush2.msra.mxu0 %v326
    %449 = vmatprep.subr.mxu0 %v320
    %450 = vmatpush2.msra.mxu0 %v319
    %451 = vmatprep.subr.mxu0 %v313
    %452 = vmatpush2.msra.mxu0 %v312
    %453 = vmatprep.subr.mxu0 %v306
    %454 = vmatpush2.msra.mxu0 %v305
    %455 = vmatprep.subr.mxu0 %v299
    %456 = vmatpush2.msra.mxu0 %v298
    %457 = vmatprep.subr.mxu0 %v292
    %458 = vmatpush2.msra.mxu0 %v291
    %459 = vmatprep.subr.mxu0 %v285
    %460 = vmatpush2.msra.mxu0 %v284
    %461 = vmatprep.subr.mxu0 %v278
    %462 = vmatpush2.msra.mxu0 %v277
    %463 = vmatprep.subr.mxu0 %v271
    %464 = vmatpush2.msra.mxu0 %v270
    %465 = vmatprep.subr.mxu0 %v264
    %466 = vmatpush2.msra.mxu0 %v263
    %467 = vmatprep.subr.mxu0 %v257
    %468 = vmatpush2.msra.mxu0 %v256
    %469 = vmatprep.mubr.f32.mxu0 %v143
    %470 = vmatmul.mubr.f32.gmra.mxu0 %v142
    %v471 = vpop.f32.mrf.mxu0
    %v472 = vadd.f32 %v373, %v471
    %v473 = vpop.f32.mrf.mxu0
    %v474 = vadd.f32 %v377, %v473
    %475 = vdwg.mxu0
    %476 = vmatprep.subr.mxu0 %v252
    %477 = vmatpush1.msra.mxu0 %v251
    %478 = vmatprep.subr.mxu0 %v245
    %479 = vmatpush1.msra.mxu0 %v244
    %480 = vmatprep.subr.mxu0 %v238
    %481 = vmatpush1.msra.mxu0 %v237
    %482 = vmatprep.subr.mxu0 %v231
    %483 = vmatpush1.msra.mxu0 %v230
    %484 = vmatprep.subr.mxu0 %v224
    %485 = vmatpush1.msra.mxu0 %v223
    %486 = vmatprep.subr.mxu0 %v217
    %487 = vmatpush1.msra.mxu0 %v216
    %488 = vmatprep.subr.mxu0 %v210
    %489 = vmatpush1.msra.mxu0 %v209
    %490 = vmatprep.subr.mxu0 %v203
    %491 = vmatpush1.msra.mxu0 %v202
    %492 = vmatprep.subr.mxu0 %v196
    %493 = vmatpush1.msra.mxu0 %v195
    %494 = vmatprep.subr.mxu0 %v189
    %495 = vmatpush1.msra.mxu0 %v188
    %496 = vmatprep.subr.mxu0 %v182
    %497 = vmatpush1.msra.mxu0 %v181
    %498 = vmatprep.subr.mxu0 %v175
    %499 = vmatpush1.msra.mxu0 %v174
    %500 = vmatprep.subr.mxu0 %v168
    %501 = vmatpush1.msra.mxu0 %v167
    %502 = vmatprep.subr.mxu0 %v161
    %503 = vmatpush1.msra.mxu0 %v160
    %504 = vmatprep.subr.mxu0 %v154
    %505 = vmatpush1.msra.mxu0 %v153
    %506 = vmatprep.subr.mxu0 %v147
    %507 = vmatpush1.msra.mxu0 %v146
    %508 = vmatprep.subr.mxu0 %v364
    %509 = vmatpush2.msra.mxu0 %v363
    %510 = vmatprep.subr.mxu0 %v357
    %511 = vmatpush2.msra.mxu0 %v356
    %512 = vmatprep.subr.mxu0 %v350
    %513 = vmatpush2.msra.mxu0 %v349
    %514 = vmatprep.subr.mxu0 %v343
    %515 = vmatpush2.msra.mxu0 %v342
    %516 = vmatprep.subr.mxu0 %v336
    %517 = vmatpush2.msra.mxu0 %v335
    %518 = vmatprep.subr.mxu0 %v329
    %519 = vmatpush2.msra.mxu0 %v328
    %520 = vmatprep.subr.mxu0 %v322
    %521 = vmatpush2.msra.mxu0 %v321
    %522 = vmatprep.subr.mxu0 %v315
    %523 = vmatpush2.msra.mxu0 %v314
    %524 = vmatprep.subr.mxu0 %v308
    %525 = vmatpush2.msra.mxu0 %v307
    %526 = vmatprep.subr.mxu0 %v301
    %527 = vmatpush2.msra.mxu0 %v300
    %528 = vmatprep.subr.mxu0 %v294
    %529 = vmatpush2.msra.mxu0 %v293
    %530 = vmatprep.subr.mxu0 %v287
    %531 = vmatpush2.msra.mxu0 %v286
    %532 = vmatprep.subr.mxu0 %v280
    %533 = vmatpush2.msra.mxu0 %v279
    %534 = vmatprep.subr.mxu0 %v273
    %535 = vmatpush2.msra.mxu0 %v272
    %536 = vmatprep.subr.mxu0 %v266
    %537 = vmatpush2.msra.mxu0 %v265
    %538 = vmatprep.subr.mxu0 %v259
    %539 = vmatpush2.msra.mxu0 %v258
    %540 = vmatprep.mubr.f32.mxu0 %v143
    %541 = vmatmul.mubr.f32.gmra.mxu0 %v142
    %v542 = vpop.f32.mrf.mxu0
    %v543 = vadd.f32 %v381, %v542
    %v544 = vpop.f32.mrf.mxu0
    %v545 = vadd.f32 %v385, %v544
    %546 = vdwg.mxu0
    %547 = vmatprep.subr.mxu0 %v254
    %548 = vmatpush1.msra.mxu0 %v253
    %549 = vmatprep.subr.mxu0 %v247
    %550 = vmatpush1.msra.mxu0 %v246
    %551 = vmatprep.subr.mxu0 %v240
    %552 = vmatpush1.msra.mxu0 %v239
    %553 = vmatprep.subr.mxu0 %v233
    %554 = vmatpush1.msra.mxu0 %v232
    %555 = vmatprep.subr.mxu0 %v226
    %556 = vmatpush1.msra.mxu0 %v225
    %557 = vmatprep.subr.mxu0 %v219
    %558 = vmatpush1.msra.mxu0 %v218
    %559 = vmatprep.subr.mxu0 %v212
    %560 = vmatpush1.msra.mxu0 %v211
    %561 = vmatprep.subr.mxu0 %v205
    %562 = vmatpush1.msra.mxu0 %v204
    %563 = vmatprep.subr.mxu0 %v198
    %564 = vmatpush1.msra.mxu0 %v197
    %565 = vmatprep.subr.mxu0 %v191
    %566 = vmatpush1.msra.mxu0 %v190
    %567 = vmatprep.subr.mxu0 %v184
    %568 = vmatpush1.msra.mxu0 %v183
    %569 = vmatprep.subr.mxu0 %v177
    %570 = vmatpush1.msra.mxu0 %v176
    %571 = vmatprep.subr.mxu0 %v170
    %572 = vmatpush1.msra.mxu0 %v169
    %573 = vmatprep.subr.mxu0 %v163
    %574 = vmatpush1.msra.mxu0 %v162
    %575 = vmatprep.subr.mxu0 %v156
    %576 = vmatpush1.msra.mxu0 %v155
    %577 = vmatprep.subr.mxu0 %v149
    %578 = vmatpush1.msra.mxu0 %v148
    %579 = vmatprep.subr.mxu0 %v366
    %580 = vmatpush2.msra.mxu0 %v365
    %581 = vmatprep.subr.mxu0 %v359
    %582 = vmatpush2.msra.mxu0 %v358
    %583 = vmatprep.subr.mxu0 %v352
    %584 = vmatpush2.msra.mxu0 %v351
    %585 = vmatprep.subr.mxu0 %v345
    %586 = vmatpush2.msra.mxu0 %v344
    %587 = vmatprep.subr.mxu0 %v338
    %588 = vmatpush2.msra.mxu0 %v337
    %589 = vmatprep.subr.mxu0 %v331
    %590 = vmatpush2.msra.mxu0 %v330
    %591 = vmatprep.subr.mxu0 %v324
    %592 = vmatpush2.msra.mxu0 %v323
    %593 = vmatprep.subr.mxu0 %v317
    %594 = vmatpush2.msra.mxu0 %v316
    %595 = vmatprep.subr.mxu0 %v310
    %596 = vmatpush2.msra.mxu0 %v309
    %597 = vmatprep.subr.mxu0 %v303
    %598 = vmatpush2.msra.mxu0 %v302
    %599 = vmatprep.subr.mxu0 %v296
    %600 = vmatpush2.msra.mxu0 %v295
    %601 = vmatprep.subr.mxu0 %v289
    %602 = vmatpush2.msra.mxu0 %v288
    %603 = vmatprep.subr.mxu0 %v282
    %604 = vmatpush2.msra.mxu0 %v281
    %605 = vmatprep.subr.mxu0 %v275
    %606 = vmatpush2.msra.mxu0 %v274
    %607 = vmatprep.subr.mxu0 %v268
    %608 = vmatpush2.msra.mxu0 %v267
    %609 = vmatprep.subr.mxu0 %v261
    %610 = vmatpush2.msra.mxu0 %v260
    %611 = vmatprep.mubr.f32.mxu0 %v143
    %612 = vmatmul.mubr.f32.gmra.mxu0 %v142
    %v613 = vpop.f32.mrf.mxu0
    %v614 = vadd.f32 %v389, %v613
    %v615 = vpop.f32.mrf.mxu0
    %v616 = vadd.f32 %v393, %v615
    %617 = vdwg.mxu0
    %618 = vmatprep.subr.mxu0 0.0
    %619 = vmatpush1.msra.mxu0 %v255
    %620 = vmatprep.subr.mxu0 0.0
    %621 = vmatpush1.msra.mxu0 %v248
    %622 = vmatprep.subr.mxu0 0.0
    %623 = vmatpush1.msra.mxu0 %v241
    %624 = vmatprep.subr.mxu0 0.0
    %625 = vmatpush1.msra.mxu0 %v234
    %626 = vmatprep.subr.mxu0 0.0
    %627 = vmatpush1.msra.mxu0 %v227
    %628 = vmatprep.subr.mxu0 0.0
    %629 = vmatpush1.msra.mxu0 %v220
    %630 = vmatprep.subr.mxu0 0.0
    %631 = vmatpush1.msra.mxu0 %v213
    %632 = vmatprep.subr.mxu0 0.0
    %633 = vmatpush1.msra.mxu0 %v206
    %634 = vmatprep.subr.mxu0 0.0
    %635 = vmatpush1.msra.mxu0 %v199
    %636 = vmatprep.subr.mxu0 0.0
    %637 = vmatpush1.msra.mxu0 %v192
    %638 = vmatprep.subr.mxu0 0.0
    %639 = vmatpush1.msra.mxu0 %v185
    %640 = vmatprep.subr.mxu0 0.0
    %641 = vmatpush1.msra.mxu0 %v178
    %642 = vmatprep.subr.mxu0 0.0
    %643 = vmatpush1.msra.mxu0 %v171
    %644 = vmatprep.subr.mxu0 0.0
    %645 = vmatpush1.msra.mxu0 %v164
    %646 = vmatprep.subr.mxu0 0.0
    %647 = vmatpush1.msra.mxu0 %v157
    %648 = vmatprep.subr.mxu0 0.0
    %649 = vmatpush1.msra.mxu0 %v150
    %650 = vmatprep.subr.mxu0 0.0
    %651 = vmatpush2.msra.mxu0 %v367
    %652 = vmatprep.subr.mxu0 0.0
    %653 = vmatpush2.msra.mxu0 %v360
    %654 = vmatprep.subr.mxu0 0.0
    %655 = vmatpush2.msra.mxu0 %v353
    %656 = vmatprep.subr.mxu0 0.0
    %657 = vmatpush2.msra.mxu0 %v346
    %658 = vmatprep.subr.mxu0 0.0
    %659 = vmatpush2.msra.mxu0 %v339
    %660 = vmatprep.subr.mxu0 0.0
    %661 = vmatpush2.msra.mxu0 %v332
    %662 = vmatprep.subr.mxu0 0.0
    %663 = vmatpush2.msra.mxu0 %v325
    %664 = vmatprep.subr.mxu0 0.0
    %665 = vmatpush2.msra.mxu0 %v318
    %666 = vmatprep.subr.mxu0 0.0
    %667 = vmatpush2.msra.mxu0 %v311
    %668 = vmatprep.subr.mxu0 0.0
    %669 = vmatpush2.msra.mxu0 %v304
    %670 = vmatprep.subr.mxu0 0.0
    %671 = vmatpush2.msra.mxu0 %v297
    %672 = vmatprep.subr.mxu0 0.0
    %673 = vmatpush2.msra.mxu0 %v290
    %674 = vmatprep.subr.mxu0 0.0
    %675 = vmatpush2.msra.mxu0 %v283
    %676 = vmatprep.subr.mxu0 0.0
    %677 = vmatpush2.msra.mxu0 %v276
    %678 = vmatprep.subr.mxu0 0.0
    %679 = vmatpush2.msra.mxu0 %v269
    %680 = vmatprep.subr.mxu0 0.0
    %681 = vmatpush2.msra.mxu0 %v262
    %682 = vmatprep.mubr.f32.mxu0 %v143
    %683 = vmatmul.mubr.f32.gmra.mxu0 %v142
    %v684 = vpop.f32.mrf.mxu0
    %v685 = vadd.f32 %v397, %v684
    %v686 = vpop.f32.mrf.mxu0
    %687 = vdwg.mxu0
    %v688 = vxor.u32 %v472, 2147483648
    %v689 = vxor.u32 %v474, 2147483648
    %v690 = vxor.u32 %v543, 2147483648
    %v691 = vxor.u32 %v545, 2147483648
    %v692 = vxor.u32 %v614, 2147483648
    %v693 = vxor.u32 %v616, 2147483648
    %v694 = vxor.u32 %v685, 2147483648
    %v695 = vmul.f32 %v688, 1.442695
    %v696 = vpow.pop %v695
    %v697 = vmul.f32 %v689, 1.442695
    %v698 = vpow.pop %v697
    %v699 = vmul.f32 %v690, 1.442695
    %v700 = vpow.pop %v699
    %v701 = vmul.f32 %v691, 1.442695
    %v702 = vpow.pop %v701
    %v703 = vmul.f32 %v692, 1.442695
    %v704 = vpow.pop %v703
    %v705 = vmul.f32 %v693, 1.442695
    %v706 = vpow.pop %v705
    %v707 = vmul.f32 %v694, 1.442695
    %v708 = vpow.pop %v707
    %v709 = vadd.f32 %v696, 1.0
    %v710 = vadd.f32 %v698, 1.0
    %v711 = vadd.f32 %v700, 1.0
    %v712 = vadd.f32 %v702, 1.0
    %v713 = vadd.f32 %v704, 1.0
    %v714 = vadd.f32 %v706, 1.0
    %v715 = vadd.f32 %v708, 1.0
    %v716 = vrcp.pop %v709
    %v717 = vmul.f32 1.0, %v716
    %v718 = vrcp.pop %v710
    %v719 = vmul.f32 1.0, %v718
    %v720 = vrcp.pop %v711
    %v721 = vmul.f32 1.0, %v720
    %v722 = vrcp.pop %v712
    %v723 = vmul.f32 1.0, %v722
    %v724 = vrcp.pop %v713
    %v725 = vmul.f32 1.0, %v724
    %v726 = vrcp.pop %v714
    %v727 = vmul.f32 1.0, %v726
    %v728 = vrcp.pop %v715
    %v729 = vmul.f32 1.0, %v728
    %730 = vst [vmem:[#allocation2] sm:$0xff] %v717
    %731 = vst [vmem:[#allocation2 + $0x8] sm:$0xff] %v719
    %732 = vst [vmem:[#allocation2 + $0x10] sm:$0xff] %v721
    %733 = vst [vmem:[#allocation2 + $0x18] sm:$0xff] %v723
    %734 = vst [vmem:[#allocation2 + $0x20] sm:$0xff] %v725
    %735 = vst [vmem:[#allocation2 + $0x28] sm:$0xff] %v727
    %vm736 = vcmask 130048
    %737 = vst.msk [vmem:[#allocation2 + $0x30] sm:$0xff] %vm736, %v729
    // Predicated region
    $region22: #{tpu_custom_call.1} parent=1 // pred_check
      _
    $region23: #{tpu_custom_call.1} parent=1 // pred_check_branch
      %739 = sbr.rel (0) target = $region25
    $region24: #{tpu_custom_call.1} parent=1 // pred_region
      %s741 = ssub.s32 896, 896
      %742 = vsyncadd [#allocation3], %s741
      %s744 = sshll.u32 [#allocation2], 4
      %s745 = int_to_ptr.vmem [resolvable:$true] %s744
      %747 = dma.vmem_to_hbm [thread:$0]  %s745, 896, %s5, [#allocation3]
    $region25: #{tpu_custom_call.1} parent=1 // pred_fallthru
      _
    // Predicated region
    $region26: #{tpu_custom_call.1} parent=1 // pred_check
      _
    $region27: #{tpu_custom_call.1} parent=1 // pred_check_branch
      %749 = sbr.rel (0) target = $region29
    $region28: #{tpu_custom_call.1} parent=1 // pred_region
      %750 = dma.done [#allocation3], 896
    $region29: #{tpu_custom_call.1} parent=1 // pred_fallthru
      _
    %751 = vsyncpa [#allocation3], 1

</llo_original>
